<compile_context>
chip_gen: v7x
topology: tpu7x:2x2x1
jax: 0.10.0
libtpu: 0.0.40
codegen_flags: <defaults>
</compile_context>

<pallas_src>
import jax
import jax.numpy as jnp
from jax.experimental import pallas as pl
from jax.experimental.pallas import tpu as pltpu

H = 0.5        # self.h
EPS = 1e-8     # self.eps


def _round_up(n, m):
    return ((n + m - 1) // m) * m


def _drop_htsk_kernel(x_ref, ws_ref, wc2_ref, bias_ref, out_ref):
    # x_ref: [TB, D]; ws_ref/wc2_ref: [D, Rp]; bias_ref: [1, Rp]; out_ref: [TB, Rp]
    x = x_ref[...].astype(jnp.float32)
    x2 = x * x                                    # VPU prep in f32
    wd = ws_ref.dtype                             # MXU operand dtype (f32, or bf16)

    # masked nanmean over features (count + bias already folded into weights):
    #   mean = x @ (2*coef*m*c / cnt)  -  x^2 @ (coef*m / cnt)  -  sum_d(coef*m*c^2)/cnt
    mean = jnp.dot(x.astype(wd), wc2_ref[...], preferred_element_type=jnp.float32)
    mean = mean - jnp.dot(x2.astype(wd), ws_ref[...], preferred_element_type=jnp.float32)
    mean = mean + bias_ref[...]                   # padded rule columns get -1e30 here

    # softmax over rules (lane axis)
    mx = jnp.max(mean, axis=1, keepdims=True)
    e = jnp.exp(mean - mx)
    inv_denom = pl.reciprocal(jnp.sum(e, axis=1, keepdims=True), approx=True)
    out_ref[...] = (e * inv_denom).astype(out_ref.dtype)


def drop_antecedent_htsk(x, centers, sigmas, keep_mask, *, tb=256,
                         mxu_dtype=jnp.float32):
    """x: [N, D] f32; centers/sigmas/keep_mask: [D, R] -> firing strengths [N, R] f32.

    mxu_dtype=jnp.bfloat16 may be used for higher MXU rate at slightly reduced
    precision (accumulation stays f32).
    """
    x = x.astype(jnp.float32)
    centers = centers.astype(jnp.float32)
    sigmas = sigmas.astype(jnp.float32)
    keep_mask = keep_mask.astype(jnp.float32)

    N, D = x.shape
    R = centers.shape[1]

    # ---- grid-invariant parameter math, hoisted out of the kernel ----------
    coef = (H / (sigmas * sigmas) + EPS) * keep_mask           # coef * keep        [D, R]
    count = jnp.sum(keep_mask, axis=0)                         # kept features/rule [R]
    inv_count = 1.0 / count  # inf if a rule lost all features -> NaN col, same as nanmean
    ws = coef * inv_count[None, :]                             # weight for  x^2 term
    wc2 = (2.0 * coef * centers) * inv_count[None, :]          # weight for  x   term
    bias = -jnp.sum(coef * centers * centers, axis=0) * inv_count   # [R]

    # ---- pad rule axis to a lane-dense multiple of 128 ----------------------
    Rp = max(128, _round_up(R, 128))
    pad_r = Rp - R
    ws = jnp.pad(ws, ((0, 0), (0, pad_r))).astype(mxu_dtype)
    wc2 = jnp.pad(wc2, ((0, 0), (0, pad_r))).astype(mxu_dtype)
    bias_row = jnp.concatenate(
        [bias, jnp.full((pad_r,), -1e30, jnp.float32)])[None, :]   # pad cols -> -1e30

    # ---- pad / tile the batch axis ------------------------------------------
    tb = min(tb, _round_up(N, 8))
    Np = _round_up(N, tb)
    if Np != N:
        x = jnp.pad(x, ((0, Np - N), (0, 0)))

    grid_spec = pltpu.PrefetchScalarGridSpec(
        num_scalar_prefetch=0,
        grid=(Np // tb,),
        in_specs=[
            pl.BlockSpec((tb, D), lambda i: (i, 0)),    # x tile (batch-tiled, streamed)
            pl.BlockSpec((D, Rp), lambda i: (0, 0)),    # coef*mask/count              (resident)
            pl.BlockSpec((D, Rp), lambda i: (0, 0)),    # 2*coef*mask*centers/count    (resident)
            pl.BlockSpec((1, Rp), lambda i: (0, 0)),    # bias row (+ softmax pad)     (resident)
        ],
        out_specs=pl.BlockSpec((tb, Rp), lambda i: (i, 0)),
    )

    out = pl.pallas_call(
        _drop_htsk_kernel,
        out_shape=jax.ShapeDtypeStruct((Np, Rp), jnp.float32),
        grid_spec=grid_spec,
        compiler_params=pltpu.CompilerParams(
            dimension_semantics=("parallel",)),   # both TCs take tiles on v7x
    )(x, ws, wc2, bias_row)

    return out[:N, :R]


def reference_forward(x, centers, sigmas, keep_mask):
    """Pure-JAX reference mirroring the PyTorch forward (training mode)."""
    coef = H / (sigmas ** 2) + EPS
    mfs = -((x[:, :, None] - centers[None]) ** 2) * coef[None]      # [N, D, R]
    drop = keep_mask[None] == 0.0
    masked = jnp.where(drop, jnp.nan, mfs)
    # nanmean over dim=1
    is_nan = jnp.isnan(masked)
    summed = jnp.where(is_nan, 0.0, masked).sum(axis=1)
    cnt = (~is_nan).astype(jnp.float32).sum(axis=1)
    mean = summed / cnt
    return jax.nn.softmax(mean, axis=1)


if __name__ == "__main__":
    # Small shapes: batch=16, in_dim=32, n_rules=16, dropout p=0.25
    N, D, R, p = 16, 32, 16, 0.25

    key = jax.random.PRNGKey(0)
    kx, kc, ks, km = jax.random.split(key, 4)

    x = jax.random.normal(kx, (N, D), dtype=jnp.float32)
    # Deterministic synthetic "init_model": centers ~ N(0,1), sigmas ~ N(1, 0.2)
    centers = jax.random.normal(kc, (D, R), dtype=jnp.float32)
    sigmas = 1.0 + 0.2 * jax.random.normal(ks, (D, R), dtype=jnp.float32)
    # nn.Dropout(p) keep-mask sampled in training mode on the ones `weight`
    # TODO(synk): dropout RNG itself is host/JAX glue, not in-kernel (matches PyTorch semantics).
    keep_mask = jax.random.bernoulli(km, 1.0 - p, (D, R)).astype(jnp.float32)

    frs = drop_antecedent_htsk(x, centers, sigmas, keep_mask)
    frs = jax.block_until_ready(frs)

    ref = reference_forward(x, centers, sigmas, keep_mask)
    assert frs.shape == (N, R)
    # tolerance accounts for pl.reciprocal(approx=True) in the softmax epilogue
    assert bool(jnp.allclose(frs, ref, atol=1e-3, rtol=1e-3)), "mismatch vs reference"
    assert bool(jnp.allclose(frs.sum(axis=1), 1.0, atol=1e-2)), "softmax rows must sum to 1"

    print("KERNEL_OK")
</pallas_src>

<mosaic_0001>
module attributes {stable_mosaic.version = 11 : i64} {
  func.func @_drop_htsk_kernel(%arg0: i32, %arg1: memref<16x32xf32, #tpu.memory_space<vmem>>, %arg2: memref<32x128xf32, #tpu.memory_space<vmem>>, %arg3: memref<32x128xf32, #tpu.memory_space<vmem>>, %arg4: memref<1x128xf32, #tpu.memory_space<vmem>>, %arg5: memref<16x128xf32, #tpu.memory_space<vmem>>) attributes {dimension_semantics = [#tpu.dimension_semantics<parallel>], iteration_bounds = array<i64: 1>, scalar_prefetch = 0 : i64, scratch_operands = 0 : i64, tpu.core_type = #tpu.core_type<tc>, window_params = [{transform_indices = @transform_0, window_bounds = array<i64: 16, 32>}, {pipeline_mode = #tpu.pipeline_mode<synchronous>, transform_indices = @transform_1, window_bounds = array<i64: 32, 128>}, {pipeline_mode = #tpu.pipeline_mode<synchronous>, transform_indices = @transform_2, window_bounds = array<i64: 32, 128>}, {pipeline_mode = #tpu.pipeline_mode<synchronous>, transform_indices = @transform_3, window_bounds = array<i64: 1, 128>}, {transform_indices = @transform_4, window_bounds = array<i64: 16, 128>}]} {
    %c0 = arith.constant 0 : index
    %c0_0 = arith.constant 0 : index
    %0 = vector.load %arg1[%c0, %c0_0] : memref<16x32xf32, #tpu.memory_space<vmem>>, vector<16x32xf32>
    %1 = arith.mulf %0, %0 : vector<16x32xf32>
    %c0_1 = arith.constant 0 : index
    %c0_2 = arith.constant 0 : index
    %2 = vector.load %arg3[%c0_1, %c0_2] : memref<32x128xf32, #tpu.memory_space<vmem>>, vector<32x128xf32>
    %cst = arith.constant dense<0.000000e+00> : vector<16x128xf32>
    %3 = tpu.matmul %0, %2, %cst {dimension_numbers = #tpu.dot_dimension_numbers<[1], [0], [0], [1], [0, 0, 1, 1], [], []>} : vector<16x32xf32>, vector<32x128xf32>, vector<16x128xf32> -> vector<16x128xf32>
    %c0_3 = arith.constant 0 : index
    %c0_4 = arith.constant 0 : index
    %4 = vector.load %arg2[%c0_3, %c0_4] : memref<32x128xf32, #tpu.memory_space<vmem>>, vector<32x128xf32>
    %cst_5 = arith.constant dense<0.000000e+00> : vector<16x128xf32>
    %5 = tpu.matmul %1, %4, %cst_5 {dimension_numbers = #tpu.dot_dimension_numbers<[1], [0], [0], [1], [0, 0, 1, 1], [], []>} : vector<16x32xf32>, vector<32x128xf32>, vector<16x128xf32> -> vector<16x128xf32>
    %6 = arith.subf %3, %5 : vector<16x128xf32>
    %c0_6 = arith.constant 0 : index
    %c0_7 = arith.constant 0 : index
    %7 = vector.load %arg4[%c0_6, %c0_7] : memref<1x128xf32, #tpu.memory_space<vmem>>, vector<1x128xf32>
    %8 = vector.broadcast %7 : vector<1x128xf32> to vector<16x128xf32>
    %9 = arith.addf %6, %8 : vector<16x128xf32>
    %cst_8 = arith.constant dense<0xFF800000> : vector<16xf32>
    %10 = vector.multi_reduction <maximumf>, %9, %cst_8 [1] : vector<16x128xf32> to vector<16xf32>
    %11 = vector.shape_cast %10 : vector<16xf32> to vector<16x1xf32>
    %12 = vector.broadcast %11 : vector<16x1xf32> to vector<16x128xf32>
    %13 = arith.subf %9, %12 : vector<16x128xf32>
    %14 = math.exp %13 : vector<16x128xf32>
    %cst_9 = arith.constant dense<0.000000e+00> : vector<16xf32>
    %15 = vector.multi_reduction <add>, %14, %cst_9 [1] : vector<16x128xf32> to vector<16xf32>
    %16 = vector.shape_cast %15 : vector<16xf32> to vector<16x1xf32>
    %17 = tpu.reciprocal %16 {approx = true} : vector<16x1xf32> -> vector<16x1xf32>
    %18 = vector.broadcast %17 : vector<16x1xf32> to vector<16x128xf32>
    %19 = arith.mulf %14, %18 : vector<16x128xf32>
    %c0_10 = arith.constant 0 : index
    %c0_11 = arith.constant 0 : index
    %20 = vector.load %arg5[%c0_10, %c0_11] : memref<16x128xf32, #tpu.memory_space<vmem>>, vector<16x128xf32>
    tpu.vector_store %arg5[%c0_10, %c0_11], %19 {strides = array<i32>} : memref<16x128xf32, #tpu.memory_space<vmem>>, vector<16x128xf32>,
    return
  }
  func.func @transform_0(%arg0: i32) -> (i32, i32) {
    %c0_i32 = arith.constant 0 : i32
    %c0_i32_0 = arith.constant 0 : i32
    return %arg0, %c0_i32 : i32, i32
  }
  func.func @transform_1(%arg0: i32) -> (i32, i32) {
    %c0_i32 = arith.constant 0 : i32
    %c0_i32_0 = arith.constant 0 : i32
    %c0_i32_1 = arith.constant 0 : i32
    return %c0_i32, %c0_i32_0 : i32, i32
  }
  func.func @transform_2(%arg0: i32) -> (i32, i32) {
    %c0_i32 = arith.constant 0 : i32
    %c0_i32_0 = arith.constant 0 : i32
    %c0_i32_1 = arith.constant 0 : i32
    return %c0_i32, %c0_i32_0 : i32, i32
  }
  func.func @transform_3(%arg0: i32) -> (i32, i32) {
    %c0_i32 = arith.constant 0 : i32
    %c0_i32_0 = arith.constant 0 : i32
    %c0_i32_1 = arith.constant 0 : i32
    return %c0_i32, %c0_i32_0 : i32, i32
  }
  func.func @transform_4(%arg0: i32) -> (i32, i32) {
    %c0_i32 = arith.constant 0 : i32
    %c0_i32_0 = arith.constant 0 : i32
    return %arg0, %c0_i32 : i32, i32
  }
}

</mosaic_0001>

<llo_original>
// kernel: tpu_custom_call.1
$region0: #{tpu_custom_call.1}
  #allocation0 [shape = 'u32[]', space=smem, size = 0x4, offset = 0x4, fixed_abs, tag = 'smem constant byte address 0x4 - core index']
  #allocation1 [shape = 'u32[144,128]{1,0:T(1,128)}', space=vmem, size = 0x12000, scoped, tag = 'internal scratch']
  %s0 = inlined_call_operand.hbm [shape: f32[16,32], index: 0, kind: input, shape index: {}]
  %s1 = inlined_call_operand.hbm [shape: f32[32,128], index: 1, kind: input, shape index: {}]
  %s2 = inlined_call_operand.hbm [shape: f32[32,128], index: 2, kind: input, shape index: {}]
  %s3 = inlined_call_operand.vmem [shape: f32[1,128], index: 3, kind: input, shape index: {}]
  %s4 = inlined_call_operand.hbm [shape: f32[16,128], index: 4, kind: output, shape index: {}]
  %s5 = sld [smem:[#allocation0]]
  $region38: #{tpu_custom_call.1} parent=0
    _
  %s7 = ssub.s32 1, %s5
  %s8 = scalar_select 0, %s7, %s5
  $region1: #{tpu_custom_call.1} parent=0
    #allocation2 [shape = 'u8[8192]{0}', space=vmem, size = 0x2000, scoped, tag = 'input window, operand 0, single buffered']
    #allocation3 [shape = 's32[1]{0}', space=sflag, size = 0x4, scoped, tag = 'scoped memory for tpu_custom_call.1']
    #allocation4 [shape = 's32[1]{0}', space=sflag, size = 0x4, scoped, tag = 'scoped memory for tpu_custom_call.1']
    #allocation5 [shape = 'u8[16384]{0}', space=vmem, size = 0x4000, scoped, tag = 'input window, operand 1, single buffered']
    #allocation6 [shape = 's32[1]{0}', space=sflag, size = 0x4, scoped, tag = 'scoped memory for tpu_custom_call.1']
    #allocation7 [shape = 'u8[16384]{0}', space=vmem, size = 0x4000, scoped, tag = 'input window, operand 2, single buffered']
    #allocation8 [shape = 'u8[8192]{0}', space=vmem, size = 0x2000, scoped, tag = 'output window, operand 0, single buffered']
    %9 = vsyncpa [#allocation3], 0
    %10 = vsyncpa [#allocation6], 0
    %11 = vsyncpa [#allocation4], 0
    // Predicated region
    $region2: #{tpu_custom_call.1} parent=1 // pred_check
      _
    $region3: #{tpu_custom_call.1} parent=1 // pred_check_branch
      %13 = sbr.rel (0) target = $region5
    $region4: #{tpu_custom_call.1} parent=1 // pred_region
      %s15 = ssub.s32 256, 256
      %16 = vsyncadd [#allocation3], %s15
      %s17 = sshll.u32 [#allocation2], 4
      %s18 = int_to_ptr.vmem [resolvable:$true] %s17
      %23 = dma.hbm_to_vmem [thread:$0]  %s0, 256, %s18, [#allocation3], 128, 128, 8
    $region5: #{tpu_custom_call.1} parent=1 // pred_fallthru
      _
    // Predicated region
    $region6: #{tpu_custom_call.1} parent=1 // pred_check
      _
    $region7: #{tpu_custom_call.1} parent=1 // pred_check_branch
      %25 = sbr.rel (0) target = $region9
    $region8: #{tpu_custom_call.1} parent=1 // pred_region
      %s27 = ssub.s32 512, 512
      %28 = vsyncadd [#allocation6], %s27
      %s29 = sshll.u32 [#allocation5], 4
      %s30 = int_to_ptr.vmem [resolvable:$true] %s29
      %35 = dma.hbm_to_vmem [thread:$0]  %s1, 512, %s30, [#allocation6], 128, 128, 8
    $region9: #{tpu_custom_call.1} parent=1 // pred_fallthru
      _
    // Predicated region
    $region10: #{tpu_custom_call.1} parent=1 // pred_check
      _
    $region11: #{tpu_custom_call.1} parent=1 // pred_check_branch
      %37 = sbr.rel (0) target = $region13
    $region12: #{tpu_custom_call.1} parent=1 // pred_region
      %s39 = ssub.s32 512, 512
      %40 = vsyncadd [#allocation6], %s39
      %s41 = sshll.u32 [#allocation7], 4
      %s42 = int_to_ptr.vmem [resolvable:$true] %s41
      %47 = dma.hbm_to_vmem [thread:$0]  %s2, 512, %s42, [#allocation6], 128, 128, 8
    $region13: #{tpu_custom_call.1} parent=1 // pred_fallthru
      _
    // Predicated region
    $region14: #{tpu_custom_call.1} parent=1 // pred_check
      _
    $region15: #{tpu_custom_call.1} parent=1 // pred_check_branch
      %49 = sbr.rel (0) target = $region17
    $region16: #{tpu_custom_call.1} parent=1 // pred_region
      _
    $region17: #{tpu_custom_call.1} parent=1 // pred_fallthru
      _
    // Predicated region
    $region18: #{tpu_custom_call.1} parent=1 // pred_check
      _
    $region19: #{tpu_custom_call.1} parent=1 // pred_check_branch
      %51 = sbr.rel (0) target = $region21
    $region20: #{tpu_custom_call.1} parent=1 // pred_region
      %52 = dma.done [#allocation3], 256
    $region21: #{tpu_custom_call.1} parent=1 // pred_fallthru
      _
    // Predicated region
    $region22: #{tpu_custom_call.1} parent=1 // pred_check
      _
    $region23: #{tpu_custom_call.1} parent=1 // pred_check_branch
      %54 = sbr.rel (0) target = $region25
    $region24: #{tpu_custom_call.1} parent=1 // pred_region
      %55 = dma.done [#allocation6], 512
    $region25: #{tpu_custom_call.1} parent=1 // pred_fallthru
      _
    // Predicated region
    $region26: #{tpu_custom_call.1} parent=1 // pred_check
      _
    $region27: #{tpu_custom_call.1} parent=1 // pred_check_branch
      %57 = sbr.rel (0) target = $region29
    $region28: #{tpu_custom_call.1} parent=1 // pred_region
      %58 = dma.done [#allocation6], 512
    $region29: #{tpu_custom_call.1} parent=1 // pred_fallthru
      _
    %v59 = vld [vmem:[#allocation2] sm:$0xff]
    %v60 = vld [vmem:[#allocation2 + $0x8] sm:$0xff]
    %v61 = vmul.f32 %v59, %v59
    %v62 = vmul.f32 %v60, %v60
    %v63 = vld [vmem:[#allocation7] sm:$0xff]
    %v64 = vld [vmem:[#allocation7 + $0x8] sm:$0xff]
    %v65 = vld [vmem:[#allocation7 + $0x10] sm:$0xff]
    %v66 = vld [vmem:[#allocation7 + $0x18] sm:$0xff]
    %vm67 = vcmask 261120
    %v69 = vsel %vm67, %v59, 0
    %v72 = vsel %vm67, %v60, 0
    %74 = vmatprep.subr.mxu0 0.0
    %75 = vmatpush1.msra.mxu0 %v63
    %76 = vmatprep.subr.mxu0 0.0
    %77 = vmatpush1.msra.mxu0 %v64
    %78 = vmatprep.subr.mxu0 0.0
    %79 = vmatpush1.msra.mxu0 %v65
    %80 = vmatprep.subr.mxu0 0.0
    %81 = vmatpush1.msra.mxu0 %v66
    %82 = vmatprep.subr.mxu0 0.0
    %83 = vmatpush1.msra.mxu0 0.0
    %84 = vmatprep.subr.mxu0 0.0
    %85 = vmatpush1.msra.mxu0 0.0
    %86 = vmatprep.subr.mxu0 0.0
    %87 = vmatpush1.msra.mxu0 0.0
    %88 = vmatprep.subr.mxu0 0.0
    %89 = vmatpush1.msra.mxu0 0.0
    %90 = vmatprep.subr.mxu0 0.0
    %91 = vmatpush1.msra.mxu0 0.0
    %92 = vmatprep.subr.mxu0 0.0
    %93 = vmatpush1.msra.mxu0 0.0
    %94 = vmatprep.subr.mxu0 0.0
    %95 = vmatpush1.msra.mxu0 0.0
    %96 = vmatprep.subr.mxu0 0.0
    %97 = vmatpush1.msra.mxu0 0.0
    %98 = vmatprep.subr.mxu0 0.0
    %99 = vmatpush1.msra.mxu0 0.0
    %100 = vmatprep.subr.mxu0 0.0
    %101 = vmatpush1.msra.mxu0 0.0
    %102 = vmatprep.subr.mxu0 0.0
    %103 = vmatpush1.msra.mxu0 0.0
    %104 = vmatprep.subr.mxu0 0.0
    %105 = vmatpush1.msra.mxu0 0.0
    %106 = vmatprep.subr.mxu0 0.0
    %107 = vmatpush1.msra.mxu0 0.0
    %108 = vmatprep.subr.mxu0 0.0
    %109 = vmatpush1.msra.mxu0 0.0
    %110 = vmatprep.subr.mxu0 0.0
    %111 = vmatpush1.msra.mxu0 0.0
    %112 = vmatprep.subr.mxu0 0.0
    %113 = vmatpush1.msra.mxu0 0.0
    %114 = vmatprep.subr.mxu0 0.0
    %115 = vmatpush1.msra.mxu0 0.0
    %116 = vmatprep.subr.mxu0 0.0
    %117 = vmatpush1.msra.mxu0 0.0
    %118 = vmatprep.subr.mxu0 0.0
    %119 = vmatpush1.msra.mxu0 0.0
    %120 = vmatprep.subr.mxu0 0.0
    %121 = vmatpush1.msra.mxu0 0.0
    %122 = vmatprep.subr.mxu0 0.0
    %123 = vmatpush1.msra.mxu0 0.0
    %124 = vmatprep.subr.mxu0 0.0
    %125 = vmatpush1.msra.mxu0 0.0
    %126 = vmatprep.subr.mxu0 0.0
    %127 = vmatpush1.msra.mxu0 0.0
    %128 = vmatprep.subr.mxu0 0.0
    %129 = vmatpush1.msra.mxu0 0.0
    %130 = vmatprep.subr.mxu0 0.0
    %131 = vmatpush1.msra.mxu0 0.0
    %132 = vmatprep.subr.mxu0 0.0
    %133 = vmatpush1.msra.mxu0 0.0
    %134 = vmatprep.subr.mxu0 0.0
    %135 = vmatpush1.msra.mxu0 0.0
    %136 = vmatprep.subr.mxu0 0.0
    %137 = vmatpush1.msra.mxu0 0.0
    %138 = vmatprep.mubr.f32.mxu0 0.0
    %139 = vmatmul.mubr.f32.gmra.mrb[0].mxu0 %v69
    %v140 = vpop.f32.mrb[0].mxu0
    %v141 = vadd.f32 0.0, %v140
    %v142 = vpop.f32.mrb[0].mxu0
    %143 = vmatprep.mubr.f32.mxu0 0.0
    %144 = vmatmul.mubr.f32.gmra.mrb[0].mxu0 %v72
    %v145 = vpop.f32.mrb[0].mxu0
    %v146 = vadd.f32 0.0, %v145
    %v147 = vpop.f32.mrb[0].mxu0
    %148 = vdwg.mxu0
    %v149 = vld [vmem:[#allocation5] sm:$0xff]
    %v150 = vld [vmem:[#allocation5 + $0x8] sm:$0xff]
    %v151 = vld [vmem:[#allocation5 + $0x10] sm:$0xff]
    %v152 = vld [vmem:[#allocation5 + $0x18] sm:$0xff]
    %v154 = vsel %vm67, %v61, 0
    %v157 = vsel %vm67, %v62, 0
    %159 = vmatprep.subr.mxu0 0.0
    %160 = vmatpush1.msra.mxu0 %v149
    %161 = vmatprep.subr.mxu0 0.0
    %162 = vmatpush1.msra.mxu0 %v150
    %163 = vmatprep.subr.mxu0 0.0
    %164 = vmatpush1.msra.mxu0 %v151
    %165 = vmatprep.subr.mxu0 0.0
    %166 = vmatpush1.msra.mxu0 %v152
    %167 = vmatprep.subr.mxu0 0.0
    %168 = vmatpush1.msra.mxu0 0.0
    %169 = vmatprep.subr.mxu0 0.0
    %170 = vmatpush1.msra.mxu0 0.0
    %171 = vmatprep.subr.mxu0 0.0
    %172 = vmatpush1.msra.mxu0 0.0
    %173 = vmatprep.subr.mxu0 0.0
    %174 = vmatpush1.msra.mxu0 0.0
    %175 = vmatprep.subr.mxu0 0.0
    %176 = vmatpush1.msra.mxu0 0.0
    %177 = vmatprep.subr.mxu0 0.0
    %178 = vmatpush1.msra.mxu0 0.0
    %179 = vmatprep.subr.mxu0 0.0
    %180 = vmatpush1.msra.mxu0 0.0
    %181 = vmatprep.subr.mxu0 0.0
    %182 = vmatpush1.msra.mxu0 0.0
    %183 = vmatprep.subr.mxu0 0.0
    %184 = vmatpush1.msra.mxu0 0.0
    %185 = vmatprep.subr.mxu0 0.0
    %186 = vmatpush1.msra.mxu0 0.0
    %187 = vmatprep.subr.mxu0 0.0
    %188 = vmatpush1.msra.mxu0 0.0
    %189 = vmatprep.subr.mxu0 0.0
    %190 = vmatpush1.msra.mxu0 0.0
    %191 = vmatprep.subr.mxu0 0.0
    %192 = vmatpush1.msra.mxu0 0.0
    %193 = vmatprep.subr.mxu0 0.0
    %194 = vmatpush1.msra.mxu0 0.0
    %195 = vmatprep.subr.mxu0 0.0
    %196 = vmatpush1.msra.mxu0 0.0
    %197 = vmatprep.subr.mxu0 0.0
    %198 = vmatpush1.msra.mxu0 0.0
    %199 = vmatprep.subr.mxu0 0.0
    %200 = vmatpush1.msra.mxu0 0.0
    %201 = vmatprep.subr.mxu0 0.0
    %202 = vmatpush1.msra.mxu0 0.0
    %203 = vmatprep.subr.mxu0 0.0
    %204 = vmatpush1.msra.mxu0 0.0
    %205 = vmatprep.subr.mxu0 0.0
    %206 = vmatpush1.msra.mxu0 0.0
    %207 = vmatprep.subr.mxu0 0.0
    %208 = vmatpush1.msra.mxu0 0.0
    %209 = vmatprep.subr.mxu0 0.0
    %210 = vmatpush1.msra.mxu0 0.0
    %211 = vmatprep.subr.mxu0 0.0
    %212 = vmatpush1.msra.mxu0 0.0
    %213 = vmatprep.subr.mxu0 0.0
    %214 = vmatpush1.msra.mxu0 0.0
    %215 = vmatprep.subr.mxu0 0.0
    %216 = vmatpush1.msra.mxu0 0.0
    %217 = vmatprep.subr.mxu0 0.0
    %218 = vmatpush1.msra.mxu0 0.0
    %219 = vmatprep.subr.mxu0 0.0
    %220 = vmatpush1.msra.mxu0 0.0
    %221 = vmatprep.subr.mxu0 0.0
    %222 = vmatpush1.msra.mxu0 0.0
    %223 = vmatprep.mubr.f32.mxu0 0.0
    %224 = vmatmul.mubr.f32.gmra.mrb[0].mxu0 %v154
    %v225 = vpop.f32.mrb[0].mxu0
    %v226 = vadd.f32 0.0, %v225
    %v227 = vpop.f32.mrb[0].mxu0
    %228 = vmatprep.mubr.f32.mxu0 0.0
    %229 = vmatmul.mubr.f32.gmra.mrb[0].mxu0 %v157
    %v230 = vpop.f32.mrb[0].mxu0
    %v231 = vadd.f32 0.0, %v230
    %v232 = vpop.f32.mrb[0].mxu0
    %233 = vdwg.mxu0
    %v234 = vsub.f32 %v141, %v226
    %v235 = vsub.f32 %v146, %v231
    %v236 = vld [vmem:[%s3] sm:$0x1]
    %v238 = vlaneseq
    %v239 = vshrl.u32 %v238, 7
    %v240 = vsub.s32 0, %v239
    %v241 = vrot.slane %v236, %v240
    %v243 = vadd.f32 %v234, %v241
    %v244 = vadd.f32 %v235, %v241
    %245 = vmax.xlane.f32.xlu0 %v243
    %v246 = vpop.xlane.xlu0 %245
    %247 = vmax.xlane.f32.xlu0 %v244
    %v248 = vpop.xlane.xlu0 %247
    %v249 = vsub.f32 %v243, %v246
    %v250 = vsub.f32 %v244, %v248
    %v251 = vmul.f32 %v249, 1.442695
    %v252 = vpow.pop %v251
    %v253 = vmul.f32 %v250, 1.442695
    %v254 = vpow.pop %v253
    %255 = vadd.xlane.f32.xlu0 %v252
    %v256 = vpop.xlane.xlu0 %255
    %257 = vadd.xlane.f32.xlu0 %v254
    %v258 = vpop.xlane.xlu0 %257
    %v259 = vrcp.pop %v256
    %v260 = vrcp.pop %v258
    %v261 = vmul.f32 %v252, %v259
    %v262 = vmul.f32 %v254, %v260
    %263 = vst [vmem:[#allocation8] sm:$0xff] %v261
    %264 = vst [vmem:[#allocation8 + $0x8] sm:$0xff] %v262
    // Predicated region
    $region30: #{tpu_custom_call.1} parent=1 // pred_check
      _
    $region31: #{tpu_custom_call.1} parent=1 // pred_check_branch
      %266 = sbr.rel (0) target = $region33
    $region32: #{tpu_custom_call.1} parent=1 // pred_region
      %s268 = ssub.s32 256, 256
      %269 = vsyncadd [#allocation4], %s268
      %s270 = sshll.u32 [#allocation8], 4
      %s271 = int_to_ptr.vmem [resolvable:$true] %s270
      %276 = dma.vmem_to_hbm [thread:$0]  %s271, 256, %s4, [#allocation4], 128, 128, 8
    $region33: #{tpu_custom_call.1} parent=1 // pred_fallthru
      _
    // Predicated region
    $region34: #{tpu_custom_call.1} parent=1 // pred_check
      _
    $region35: #{tpu_custom_call.1} parent=1 // pred_check_branch
      %278 = sbr.rel (0) target = $region37
    $region36: #{tpu_custom_call.1} parent=1 // pred_region
      %279 = dma.done [#allocation4], 256
    $region37: #{tpu_custom_call.1} parent=1 // pred_fallthru
      _
    %280 = vsyncpa [#allocation3], 1
    %281 = vsyncpa [#allocation6], 1
    %282 = vsyncpa [#allocation4], 1

</llo_original>
